<compile_context>
chip_gen: v7x
topology: tpu7x:2x2x1
jax: 0.10.0
libtpu: 0.0.40
codegen_flags: <defaults>
</compile_context>

<pallas_src>
import math
from functools import partial

import jax
import jax.numpy as jnp
from jax import lax
from jax.experimental import pallas as pl
from jax.experimental.pallas import tpu as pltpu


def _round_up(a, b):
    return (a + b - 1) // b * b


def _mlp_kernel(x_ref, w_ref, b_ref, g_ref, beta_ref, o_ref, *, out_dim, eps):
    # x_ref: (TM, IN_PAD)  w_ref: (IN_PAD, OUT_PAD)  b/g/beta: (1, OUT_PAD)  o_ref: (TM, OUT_PAD)
    # Native-dtype operands straight into the MXU; f32 accumulation.
    y = jnp.dot(x_ref[...], w_ref[...], preferred_element_type=jnp.float32)

    # One-time loads/casts of the small resident vectors (hoisted out of the math).
    b = b_ref[...].astype(jnp.float32)
    g = g_ref[...].astype(jnp.float32)
    beta = beta_ref[...].astype(jnp.float32)

    y = y + b  # Linear: x @ W^T + b (W passed pre-transposed, zero-padded)

    # LayerNorm over the real out_dim (biased variance, affine). The feature axis may be
    # zero-padded to a lane-dense multiple of 128, so mask the statistics.
    out_pad = y.shape[-1]
    if out_pad == out_dim:
        mean = jnp.mean(y, axis=-1, keepdims=True)
        cen = y - mean
        var = jnp.mean(cen * cen, axis=-1, keepdims=True)
    else:
        lane = lax.broadcasted_iota(jnp.int32, y.shape, 1)
        mask = lane < out_dim
        inv_n = jnp.float32(1.0 / out_dim)
        mean = jnp.sum(jnp.where(mask, y, 0.0), axis=-1, keepdims=True) * inv_n
        cen = jnp.where(mask, y - mean, 0.0)
        var = jnp.sum(cen * cen, axis=-1, keepdims=True) * inv_n

    yn = (y - mean) * lax.rsqrt(var + jnp.float32(eps))
    yn = yn * g + beta

    # GELU (exact / erf form, matching torch.nn.GELU default).
    inv_sqrt2 = jnp.float32(1.0 / math.sqrt(2.0))
    out = 0.5 * yn * (1.0 + lax.erf(yn * inv_sqrt2))

    o_ref[...] = out.astype(o_ref.dtype)  # padded lanes/rows are sliced off in the wrapper


def mlp_pallas(x, w, b, gamma, beta, *, tm=256, eps=1e-5, interpret=False):
    """x: (..., in_dim); w: (out_dim, in_dim) (torch nn.Linear layout). Dropout p=0.0 is identity."""
    in_dim = x.shape[-1]
    out_dim = w.shape[0]
    lead = x.shape[:-1]
    x2 = x.reshape(-1, in_dim)
    n = x2.shape[0]

    # Row tile: big enough to feed the MXU, never wastefully larger than the row count,
    # aligned to the sublane packing (8 for f32, 16 for bf16).
    row_align = 16 if x.dtype == jnp.bfloat16 else 8
    tm_eff = min(tm, _round_up(n, row_align))
    tm_eff = max(row_align, _round_up(tm_eff, row_align))
    n_pad = _round_up(n, tm_eff)

    # Lane-dense feature axes: zero padding keeps the matmul exact; LayerNorm is masked in-kernel.
    in_pad = _round_up(in_dim, 128)
    out_pad = _round_up(out_dim, 128)

    x2 = jnp.pad(x2, ((0, n_pad - n), (0, in_pad - in_dim)))
    w_t = jnp.pad(w.T, ((0, in_pad - in_dim), (0, out_pad - out_dim)))
    b2 = jnp.pad(b, (0, out_pad - out_dim)).reshape(1, out_pad)
    g2 = jnp.pad(gamma, (0, out_pad - out_dim), constant_values=1.0).reshape(1, out_pad)
    be2 = jnp.pad(beta, (0, out_pad - out_dim)).reshape(1, out_pad)

    # VMEM budget: x/out tiles double-buffered; the weight block has a constant index_map
    # (DMA'd only once) but still occupies two buffers. Budget for all of it explicitly.
    # TODO(synk): for weights too large for v7x's 64 MiB VMEM, add a K (in_dim) reduction grid
    # axis with an f32 accumulator scratch and defer the LayerNorm/GELU epilogue via pl.when.
    esz_x = jnp.dtype(x.dtype).itemsize
    esz_w = jnp.dtype(w_t.dtype).itemsize
    vmem_need = (2 * tm_eff * (in_pad + out_pad) * esz_x      # x + out tiles, double-buffered
                 + 2 * in_pad * out_pad * esz_w               # weight block (2 buffers)
                 + 8 * out_pad * 4                            # bias/gamma/beta
                 + 2 * tm_eff * out_pad * 4)                  # f32 intermediates headroom
    vmem_limit = int(min(max(vmem_need, 32 * 1024 * 1024), 64 * 1024 * 1024))

    kernel = partial(_mlp_kernel, out_dim=out_dim, eps=eps)

    out = pl.pallas_call(
        kernel,
        out_shape=jax.ShapeDtypeStruct((n_pad, out_pad), x.dtype),
        grid_spec=pltpu.PrefetchScalarGridSpec(
            num_scalar_prefetch=0,
            grid=(n_pad // tm_eff,),
            in_specs=[
                pl.BlockSpec((tm_eff, in_pad), lambda i: (i, 0)),
                pl.BlockSpec((in_pad, out_pad), lambda i: (0, 0)),
                pl.BlockSpec((1, out_pad), lambda i: (0, 0)),
                pl.BlockSpec((1, out_pad), lambda i: (0, 0)),
                pl.BlockSpec((1, out_pad), lambda i: (0, 0)),
            ],
            out_specs=pl.BlockSpec((tm_eff, out_pad), lambda i: (i, 0)),
        ),
        compiler_params=pltpu.CompilerParams(
            dimension_semantics=("parallel",),   # row axis shards across v7x's 2 TensorCores
            vmem_limit_bytes=vmem_limit,
        ),
        interpret=interpret,
    )(x2, w_t, b2, g2, be2)

    out = out[:n, :out_dim]
    return out.reshape(*lead, out_dim)


def mlp_reference(x, w, b, gamma, beta, eps=1e-5):
    y = x @ w.T + b
    mean = jnp.mean(y, axis=-1, keepdims=True)
    var = jnp.mean((y - mean) ** 2, axis=-1, keepdims=True)
    yn = (y - mean) / jnp.sqrt(var + eps)
    yn = yn * gamma + beta
    return 0.5 * yn * (1.0 + lax.erf(yn / jnp.sqrt(2.0)))


if __name__ == "__main__":
    key = jax.random.PRNGKey(0)
    B, S, IN_DIM, OUT_DIM = 2, 8, 32, 32

    k_x, k_w, k_b = jax.random.split(key, 3)
    x = jax.random.normal(k_x, (B, S, IN_DIM), dtype=jnp.float32)

    # nn.Linear init: U(-1/sqrt(in_dim), 1/sqrt(in_dim)) for weight and bias.
    bound = 1.0 / math.sqrt(IN_DIM)
    w = jax.random.uniform(k_w, (OUT_DIM, IN_DIM), minval=-bound, maxval=bound,
                           dtype=jnp.float32)
    b = jax.random.uniform(k_b, (OUT_DIM,), minval=-bound, maxval=bound,
                           dtype=jnp.float32)
    # nn.LayerNorm init: gamma=1, beta=0.
    gamma = jnp.ones((OUT_DIM,), dtype=jnp.float32)
    beta = jnp.zeros((OUT_DIM,), dtype=jnp.float32)

    out = mlp_pallas(x, w, b, gamma, beta)
    out = jax.block_until_ready(out)

    ref = mlp_reference(x, w, b, gamma, beta)
    assert out.shape == (B, S, OUT_DIM)
    assert jnp.allclose(out, ref, atol=1e-5, rtol=1e-5), float(jnp.max(jnp.abs(out - ref)))

    print("KERNEL_OK")
</pallas_src>

<mosaic_0001>
module attributes {stable_mosaic.version = 11 : i64} {
  func.func @_mlp_kernel(%arg0: i32, %arg1: memref<16x128xf32, #tpu.memory_space<vmem>>, %arg2: memref<128x128xf32, #tpu.memory_space<vmem>>, %arg3: memref<1x128xf32, #tpu.memory_space<vmem>>, %arg4: memref<1x128xf32, #tpu.memory_space<vmem>>, %arg5: memref<1x128xf32, #tpu.memory_space<vmem>>, %arg6: memref<16x128xf32, #tpu.memory_space<vmem>>) attributes {dimension_semantics = [#tpu.dimension_semantics<parallel>], iteration_bounds = array<i64: 1>, scalar_prefetch = 0 : i64, scratch_operands = 0 : i64, tpu.core_type = #tpu.core_type<tc>, window_params = [{transform_indices = @transform_0, window_bounds = array<i64: 16, 128>}, {pipeline_mode = #tpu.pipeline_mode<synchronous>, transform_indices = @transform_1, window_bounds = array<i64: 128, 128>}, {pipeline_mode = #tpu.pipeline_mode<synchronous>, transform_indices = @transform_2, window_bounds = array<i64: 1, 128>}, {pipeline_mode = #tpu.pipeline_mode<synchronous>, transform_indices = @transform_3, window_bounds = array<i64: 1, 128>}, {pipeline_mode = #tpu.pipeline_mode<synchronous>, transform_indices = @transform_4, window_bounds = array<i64: 1, 128>}, {transform_indices = @transform_5, window_bounds = array<i64: 16, 128>}]} {
    %c0 = arith.constant 0 : index
    %c0_0 = arith.constant 0 : index
    %0 = vector.load %arg1[%c0, %c0_0] : memref<16x128xf32, #tpu.memory_space<vmem>>, vector<16x128xf32>
    %c0_1 = arith.constant 0 : index
    %c0_2 = arith.constant 0 : index
    %1 = vector.load %arg2[%c0_1, %c0_2] : memref<128x128xf32, #tpu.memory_space<vmem>>, vector<128x128xf32>
    %cst = arith.constant dense<0.000000e+00> : vector<16x128xf32>
    %2 = tpu.matmul %0, %1, %cst {dimension_numbers = #tpu.dot_dimension_numbers<[1], [0], [0], [1], [0, 0, 1, 1], [], []>} : vector<16x128xf32>, vector<128x128xf32>, vector<16x128xf32> -> vector<16x128xf32>
    %c0_3 = arith.constant 0 : index
    %c0_4 = arith.constant 0 : index
    %3 = vector.load %arg3[%c0_3, %c0_4] : memref<1x128xf32, #tpu.memory_space<vmem>>, vector<1x128xf32>
    %c0_5 = arith.constant 0 : index
    %c0_6 = arith.constant 0 : index
    %4 = vector.load %arg4[%c0_5, %c0_6] : memref<1x128xf32, #tpu.memory_space<vmem>>, vector<1x128xf32>
    %c0_7 = arith.constant 0 : index
    %c0_8 = arith.constant 0 : index
    %5 = vector.load %arg5[%c0_7, %c0_8] : memref<1x128xf32, #tpu.memory_space<vmem>>, vector<1x128xf32>
    %6 = vector.broadcast %3 : vector<1x128xf32> to vector<16x128xf32>
    %7 = arith.addf %2, %6 : vector<16x128xf32>
    %8 = tpu.iota {dimensions = array<i32: 1>} : vector<16x128xi32>
    %c32_i32 = arith.constant 32 : i32
    %9 = vector.broadcast %c32_i32 : i32 to vector<16x128xi32>
    %10 = arith.cmpi slt, %8, %9 : vector<16x128xi32>
    %cst_9 = arith.constant 0.000000e+00 : f32
    %11 = vector.broadcast %cst_9 : f32 to vector<16x128xf32>
    %12 = arith.select %10, %7, %11 : vector<16x128xi1>, vector<16x128xf32>
    %cst_10 = arith.constant dense<0.000000e+00> : vector<16xf32>
    %13 = vector.multi_reduction <add>, %12, %cst_10 [1] : vector<16x128xf32> to vector<16xf32>
    %14 = vector.shape_cast %13 : vector<16xf32> to vector<16x1xf32>
    %cst_11 = arith.constant 3.125000e-02 : f32
    %15 = vector.broadcast %cst_11 : f32 to vector<16x1xf32>
    %16 = arith.mulf %14, %15 : vector<16x1xf32>
    %17 = vector.broadcast %16 : vector<16x1xf32> to vector<16x128xf32>
    %18 = arith.subf %7, %17 : vector<16x128xf32>
    %cst_12 = arith.constant 0.000000e+00 : f32
    %19 = vector.broadcast %cst_12 : f32 to vector<16x128xf32>
    %20 = arith.select %10, %18, %19 : vector<16x128xi1>, vector<16x128xf32>
    %21 = arith.mulf %20, %20 : vector<16x128xf32>
    %cst_13 = arith.constant dense<0.000000e+00> : vector<16xf32>
    %22 = vector.multi_reduction <add>, %21, %cst_13 [1] : vector<16x128xf32> to vector<16xf32>
    %23 = vector.shape_cast %22 : vector<16xf32> to vector<16x1xf32>
    %cst_14 = arith.constant 3.125000e-02 : f32
    %24 = vector.broadcast %cst_14 : f32 to vector<16x1xf32>
    %25 = arith.mulf %23, %24 : vector<16x1xf32>
    %26 = vector.broadcast %16 : vector<16x1xf32> to vector<16x128xf32>
    %27 = arith.subf %7, %26 : vector<16x128xf32>
    %cst_15 = arith.constant 9.99999974E-6 : f32
    %28 = vector.broadcast %cst_15 : f32 to vector<16x1xf32>
    %29 = arith.addf %25, %28 : vector<16x1xf32>
    %30 = math.rsqrt %29 : vector<16x1xf32>
    %31 = vector.broadcast %30 : vector<16x1xf32> to vector<16x128xf32>
    %32 = arith.mulf %27, %31 : vector<16x128xf32>
    %33 = vector.broadcast %4 : vector<1x128xf32> to vector<16x128xf32>
    %34 = arith.mulf %32, %33 : vector<16x128xf32>
    %35 = vector.broadcast %5 : vector<1x128xf32> to vector<16x128xf32>
    %36 = arith.addf %34, %35 : vector<16x128xf32>
    %cst_16 = arith.constant 5.000000e-01 : f32
    %37 = vector.broadcast %cst_16 : f32 to vector<16x128xf32>
    %38 = arith.mulf %37, %36 : vector<16x128xf32>
    %cst_17 = arith.constant 0.707106769 : f32
    %39 = vector.broadcast %cst_17 : f32 to vector<16x128xf32>
    %40 = arith.mulf %36, %39 : vector<16x128xf32>
    %41 = math.erf %40 : vector<16x128xf32>
    %cst_18 = arith.constant 1.000000e+00 : f32
    %42 = vector.broadcast %cst_18 : f32 to vector<16x128xf32>
    %43 = arith.addf %42, %41 : vector<16x128xf32>
    %44 = arith.mulf %38, %43 : vector<16x128xf32>
    %c0_19 = arith.constant 0 : index
    %c0_20 = arith.constant 0 : index
    %45 = vector.load %arg6[%c0_19, %c0_20] : memref<16x128xf32, #tpu.memory_space<vmem>>, vector<16x128xf32>
    tpu.vector_store %arg6[%c0_19, %c0_20], %44 {strides = array<i32>} : memref<16x128xf32, #tpu.memory_space<vmem>>, vector<16x128xf32>,
    return
  }
  func.func @transform_0(%arg0: i32) -> (i32, i32) {
    %c0_i32 = arith.constant 0 : i32
    %c0_i32_0 = arith.constant 0 : i32
    return %arg0, %c0_i32 : i32, i32
  }
  func.func @transform_1(%arg0: i32) -> (i32, i32) {
    %c0_i32 = arith.constant 0 : i32
    %c0_i32_0 = arith.constant 0 : i32
    %c0_i32_1 = arith.constant 0 : i32
    return %c0_i32, %c0_i32_0 : i32, i32
  }
  func.func @transform_2(%arg0: i32) -> (i32, i32) {
    %c0_i32 = arith.constant 0 : i32
    %c0_i32_0 = arith.constant 0 : i32
    %c0_i32_1 = arith.constant 0 : i32
    return %c0_i32, %c0_i32_0 : i32, i32
  }
  func.func @transform_3(%arg0: i32) -> (i32, i32) {
    %c0_i32 = arith.constant 0 : i32
    %c0_i32_0 = arith.constant 0 : i32
    %c0_i32_1 = arith.constant 0 : i32
    return %c0_i32, %c0_i32_0 : i32, i32
  }
  func.func @transform_4(%arg0: i32) -> (i32, i32) {
    %c0_i32 = arith.constant 0 : i32
    %c0_i32_0 = arith.constant 0 : i32
    %c0_i32_1 = arith.constant 0 : i32
    return %c0_i32, %c0_i32_0 : i32, i32
  }
  func.func @transform_5(%arg0: i32) -> (i32, i32) {
    %c0_i32 = arith.constant 0 : i32
    %c0_i32_0 = arith.constant 0 : i32
    return %arg0, %c0_i32 : i32, i32
  }
}

</mosaic_0001>

<llo_original>
// kernel: tpu_custom_call.1
$region0: #{tpu_custom_call.1}
  #allocation0 [shape = 'u32[]', space=smem, size = 0x4, offset = 0x4, fixed_abs, tag = 'smem constant byte address 0x4 - core index']
  #allocation1 [shape = 'u32[144,128]{1,0:T(1,128)}', space=vmem, size = 0x12000, scoped, tag = 'internal scratch']
  %s0 = inlined_call_operand.hbm [shape: f32[16,128], index: 0, kind: input, shape index: {}]
  %s1 = inlined_call_operand.hbm [shape: f32[128,128], index: 1, kind: input, shape index: {}]
  %s2 = inlined_call_operand.vmem [shape: f32[1,128], index: 2, kind: input, shape index: {}]
  %s3 = inlined_call_operand.vmem [shape: f32[1,128], index: 3, kind: input, shape index: {}]
  %s4 = inlined_call_operand.vmem [shape: f32[1,128], index: 4, kind: input, shape index: {}]
  %s5 = inlined_call_operand.hbm [shape: f32[16,128], index: 5, kind: output, shape index: {}]
  %s6 = sld [smem:[#allocation0]]
  $region38: #{tpu_custom_call.1} parent=0
    _
  %s8 = ssub.s32 1, %s6
  %s9 = scalar_select 0, %s8, %s6
  $region1: #{tpu_custom_call.1} parent=0
    #allocation2 [shape = 'u8[8192]{0}', space=vmem, size = 0x2000, scoped, tag = 'input window, operand 0, single buffered']
    #allocation3 [shape = 's32[1]{0}', space=sflag, size = 0x4, scoped, tag = 'scoped memory for tpu_custom_call.1']
    #allocation4 [shape = 's32[1]{0}', space=sflag, size = 0x4, scoped, tag = 'scoped memory for tpu_custom_call.1']
    #allocation5 [shape = 'u8[65536]{0}', space=vmem, size = 0x10000, scoped, tag = 'input window, operand 1, single buffered']
    #allocation6 [shape = 's32[1]{0}', space=sflag, size = 0x4, scoped, tag = 'scoped memory for tpu_custom_call.1']
    #allocation7 [shape = 'u8[8192]{0}', space=vmem, size = 0x2000, scoped, tag = 'output window, operand 0, single buffered']
    %10 = vsyncpa [#allocation3], 0
    %11 = vsyncpa [#allocation6], 0
    %12 = vsyncpa [#allocation4], 0
    // Predicated region
    $region2: #{tpu_custom_call.1} parent=1 // pred_check
      _
    $region3: #{tpu_custom_call.1} parent=1 // pred_check_branch
      %14 = sbr.rel (0) target = $region5
    $region4: #{tpu_custom_call.1} parent=1 // pred_region
      %s16 = ssub.s32 256, 256
      %17 = vsyncadd [#allocation3], %s16
      %s18 = sshll.u32 [#allocation2], 4
      %s19 = int_to_ptr.vmem [resolvable:$true] %s18
      %24 = dma.hbm_to_vmem [thread:$0]  %s0, 256, %s19, [#allocation3], 128, 128, 8
    $region5: #{tpu_custom_call.1} parent=1 // pred_fallthru
      _
    // Predicated region
    $region6: #{tpu_custom_call.1} parent=1 // pred_check
      _
    $region7: #{tpu_custom_call.1} parent=1 // pred_check_branch
      %26 = sbr.rel (0) target = $region9
    $region8: #{tpu_custom_call.1} parent=1 // pred_region
      %s28 = ssub.s32 2048, 2048
      %29 = vsyncadd [#allocation6], %s28
      %s30 = sshll.u32 [#allocation5], 4
      %s31 = int_to_ptr.vmem [resolvable:$true] %s30
      %36 = dma.hbm_to_vmem [thread:$0]  %s1, 2048, %s31, [#allocation6], 128, 128, 8
    $region9: #{tpu_custom_call.1} parent=1 // pred_fallthru
      _
    // Predicated region
    $region10: #{tpu_custom_call.1} parent=1 // pred_check
      _
    $region11: #{tpu_custom_call.1} parent=1 // pred_check_branch
      %38 = sbr.rel (0) target = $region13
    $region12: #{tpu_custom_call.1} parent=1 // pred_region
      _
    $region13: #{tpu_custom_call.1} parent=1 // pred_fallthru
      _
    // Predicated region
    $region14: #{tpu_custom_call.1} parent=1 // pred_check
      _
    $region15: #{tpu_custom_call.1} parent=1 // pred_check_branch
      %40 = sbr.rel (0) target = $region17
    $region16: #{tpu_custom_call.1} parent=1 // pred_region
      _
    $region17: #{tpu_custom_call.1} parent=1 // pred_fallthru
      _
    // Predicated region
    $region18: #{tpu_custom_call.1} parent=1 // pred_check
      _
    $region19: #{tpu_custom_call.1} parent=1 // pred_check_branch
      %42 = sbr.rel (0) target = $region21
    $region20: #{tpu_custom_call.1} parent=1 // pred_region
      _
    $region21: #{tpu_custom_call.1} parent=1 // pred_fallthru
      _
    // Predicated region
    $region22: #{tpu_custom_call.1} parent=1 // pred_check
      _
    $region23: #{tpu_custom_call.1} parent=1 // pred_check_branch
      %44 = sbr.rel (0) target = $region25
    $region24: #{tpu_custom_call.1} parent=1 // pred_region
      %45 = dma.done [#allocation3], 256
    $region25: #{tpu_custom_call.1} parent=1 // pred_fallthru
      _
    // Predicated region
    $region26: #{tpu_custom_call.1} parent=1 // pred_check
      _
    $region27: #{tpu_custom_call.1} parent=1 // pred_check_branch
      %47 = sbr.rel (0) target = $region29
    $region28: #{tpu_custom_call.1} parent=1 // pred_region
      %48 = dma.done [#allocation6], 2048
    $region29: #{tpu_custom_call.1} parent=1 // pred_fallthru
      _
    %v49 = vld [vmem:[#allocation2] sm:$0xff]
    %v50 = vld [vmem:[#allocation2 + $0x8] sm:$0xff]
    %v51 = vld [vmem:[#allocation5] sm:$0xff]
    %v52 = vld [vmem:[#allocation5 + $0x8] sm:$0xff]
    %v53 = vld [vmem:[#allocation5 + $0x10] sm:$0xff]
    %v54 = vld [vmem:[#allocation5 + $0x18] sm:$0xff]
    %v55 = vld [vmem:[#allocation5 + $0x20] sm:$0xff]
    %v56 = vld [vmem:[#allocation5 + $0x28] sm:$0xff]
    %v57 = vld [vmem:[#allocation5 + $0x30] sm:$0xff]
    %v58 = vld [vmem:[#allocation5 + $0x38] sm:$0xff]
    %v59 = vld [vmem:[#allocation5 + $0x40] sm:$0xff]
    %v60 = vld [vmem:[#allocation5 + $0x48] sm:$0xff]
    %v61 = vld [vmem:[#allocation5 + $0x50] sm:$0xff]
    %v62 = vld [vmem:[#allocation5 + $0x58] sm:$0xff]
    %v63 = vld [vmem:[#allocation5 + $0x60] sm:$0xff]
    %v64 = vld [vmem:[#allocation5 + $0x68] sm:$0xff]
    %v65 = vld [vmem:[#allocation5 + $0x70] sm:$0xff]
    %v66 = vld [vmem:[#allocation5 + $0x78] sm:$0xff]
    %v67 = vld [vmem:[%s2] sm:$0x1]
    %v68 = vld [vmem:[%s3] sm:$0x1]
    %v69 = vld [vmem:[%s4] sm:$0x1]
    %v71 = vlaneseq
    %v72 = vshrl.u32 %v71, 7
    %v73 = vsub.s32 0, %v72
    %v74 = vrot.slane %v67, %v73
    %76 = vmatprep.subr.mxu0 0.0
    %77 = vmatpush1.msra.mxu0 %v51
    %78 = vmatprep.subr.mxu0 0.0
    %79 = vmatpush1.msra.mxu0 %v52
    %80 = vmatprep.subr.mxu0 0.0
    %81 = vmatpush1.msra.mxu0 %v53
    %82 = vmatprep.subr.mxu0 0.0
    %83 = vmatpush1.msra.mxu0 %v54
    %84 = vmatprep.subr.mxu0 0.0
    %85 = vmatpush1.msra.mxu0 %v55
    %86 = vmatprep.subr.mxu0 0.0
    %87 = vmatpush1.msra.mxu0 %v56
    %88 = vmatprep.subr.mxu0 0.0
    %89 = vmatpush1.msra.mxu0 %v57
    %90 = vmatprep.subr.mxu0 0.0
    %91 = vmatpush1.msra.mxu0 %v58
    %92 = vmatprep.subr.mxu0 0.0
    %93 = vmatpush1.msra.mxu0 %v59
    %94 = vmatprep.subr.mxu0 0.0
    %95 = vmatpush1.msra.mxu0 %v60
    %96 = vmatprep.subr.mxu0 0.0
    %97 = vmatpush1.msra.mxu0 %v61
    %98 = vmatprep.subr.mxu0 0.0
    %99 = vmatpush1.msra.mxu0 %v62
    %100 = vmatprep.subr.mxu0 0.0
    %101 = vmatpush1.msra.mxu0 %v63
    %102 = vmatprep.subr.mxu0 0.0
    %103 = vmatpush1.msra.mxu0 %v64
    %104 = vmatprep.subr.mxu0 0.0
    %105 = vmatpush1.msra.mxu0 %v65
    %106 = vmatprep.subr.mxu0 0.0
    %107 = vmatpush1.msra.mxu0 %v66
    %108 = vmatprep.subr.mxu0 0.0
    %109 = vmatpush1.msra.mxu0 0.0
    %110 = vmatprep.subr.mxu0 0.0
    %111 = vmatpush1.msra.mxu0 0.0
    %112 = vmatprep.subr.mxu0 0.0
    %113 = vmatpush1.msra.mxu0 0.0
    %114 = vmatprep.subr.mxu0 0.0
    %115 = vmatpush1.msra.mxu0 0.0
    %116 = vmatprep.subr.mxu0 0.0
    %117 = vmatpush1.msra.mxu0 0.0
    %118 = vmatprep.subr.mxu0 0.0
    %119 = vmatpush1.msra.mxu0 0.0
    %120 = vmatprep.subr.mxu0 0.0
    %121 = vmatpush1.msra.mxu0 0.0
    %122 = vmatprep.subr.mxu0 0.0
    %123 = vmatpush1.msra.mxu0 0.0
    %124 = vmatprep.subr.mxu0 0.0
    %125 = vmatpush1.msra.mxu0 0.0
    %126 = vmatprep.subr.mxu0 0.0
    %127 = vmatpush1.msra.mxu0 0.0
    %128 = vmatprep.subr.mxu0 0.0
    %129 = vmatpush1.msra.mxu0 0.0
    %130 = vmatprep.subr.mxu0 0.0
    %131 = vmatpush1.msra.mxu0 0.0
    %132 = vmatprep.subr.mxu0 0.0
    %133 = vmatpush1.msra.mxu0 0.0
    %134 = vmatprep.subr.mxu0 0.0
    %135 = vmatpush1.msra.mxu0 0.0
    %136 = vmatprep.subr.mxu0 0.0
    %137 = vmatpush1.msra.mxu0 0.0
    %138 = vmatprep.subr.mxu0 0.0
    %139 = vmatpush1.msra.mxu0 0.0
    %140 = vmatprep.mubr.f32.mxu0 0.0
    %141 = vmatmul.mubr.f32.gmra.mrb[0].mxu0 %v49
    %v142 = vpop.f32.mrb[0].mxu0
    %v143 = vadd.f32 %v74, %v142
    %v144 = vpop.f32.mrb[0].mxu0
    %145 = vmatprep.mubr.f32.mxu0 0.0
    %146 = vmatmul.mubr.f32.gmra.mrb[0].mxu0 %v50
    %v147 = vpop.f32.mrb[0].mxu0
    %v148 = vadd.f32 %v74, %v147
    %v149 = vpop.f32.mrb[0].mxu0
    %150 = vdwg.mxu0
    %v151 = vlaneseq
    %v152 = vand.u32 %v151, 127
    %vm153 = vcmp.lt.s32.totalorder %v152, 32
    %v154 = vsel %vm153, %v143, 0.0
    %v155 = vsel %vm153, %v148, 0.0
    %156 = vadd.xlane.f32.xlu0 %v154
    %v157 = vpop.xlane.xlu0 %156
    %158 = vadd.xlane.f32.xlu0 %v155
    %v159 = vpop.xlane.xlu0 %158
    %v160 = vmul.f32 %v157, 0.03125
    %v161 = vmul.f32 %v159, 0.03125
    %v162 = vsub.f32 %v143, %v160
    %v163 = vsub.f32 %v148, %v161
    %v164 = vsel %vm153, %v162, 0.0
    %v165 = vsel %vm153, %v163, 0.0
    %v166 = vmul.f32 %v164, %v164
    %v167 = vmul.f32 %v165, %v165
    %168 = vadd.xlane.f32.xlu0 %v166
    %v169 = vpop.xlane.xlu0 %168
    %170 = vadd.xlane.f32.xlu0 %v167
    %v171 = vpop.xlane.xlu0 %170
    %v172 = vmul.f32 %v169, 0.03125
    %v173 = vmul.f32 %v171, 0.03125
    %v174 = vadd.f32 %v172, 1e-05
    %v175 = vadd.f32 %v173, 1e-05
    %v176 = vrsqrt.pop %v174
    %v177 = vrsqrt.pop %v175
    %v178 = vmul.f32 %v162, %v176
    %v179 = vmul.f32 %v163, %v177
    %v181 = vlaneseq
    %v182 = vshrl.u32 %v181, 7
    %v183 = vsub.s32 0, %v182
    %v184 = vrot.slane %v68, %v183
    %v186 = vmul.f32 %v178, %v184
    %v187 = vmul.f32 %v179, %v184
    %v189 = vlaneseq
    %v190 = vshrl.u32 %v189, 7
    %v191 = vsub.s32 0, %v190
    %v192 = vrot.slane %v69, %v191
    %v194 = vadd.f32 %v186, %v192
    %v195 = vadd.f32 %v187, %v192
    %v196 = vmul.f32 %v194, 0.5
    %v197 = vmul.f32 %v195, 0.5
    %v198 = vmul.f32 %v194, 0.70710677
    %v199 = vmul.f32 %v195, 0.70710677
    %v200 = verf.f32.pop %v198
    %v201 = verf.f32.pop %v199
    %v202 = vadd.f32 %v200, 1.0
    %v203 = vadd.f32 %v201, 1.0
    %v204 = vmul.f32 %v196, %v202
    %v205 = vmul.f32 %v197, %v203
    %206 = vst [vmem:[#allocation7] sm:$0xff] %v204
    %207 = vst [vmem:[#allocation7 + $0x8] sm:$0xff] %v205
    // Predicated region
    $region30: #{tpu_custom_call.1} parent=1 // pred_check
      _
    $region31: #{tpu_custom_call.1} parent=1 // pred_check_branch
      %209 = sbr.rel (0) target = $region33
    $region32: #{tpu_custom_call.1} parent=1 // pred_region
      %s211 = ssub.s32 256, 256
      %212 = vsyncadd [#allocation4], %s211
      %s213 = sshll.u32 [#allocation7], 4
      %s214 = int_to_ptr.vmem [resolvable:$true] %s213
      %219 = dma.vmem_to_hbm [thread:$0]  %s214, 256, %s5, [#allocation4], 128, 128, 8
    $region33: #{tpu_custom_call.1} parent=1 // pred_fallthru
      _
    // Predicated region
    $region34: #{tpu_custom_call.1} parent=1 // pred_check
      _
    $region35: #{tpu_custom_call.1} parent=1 // pred_check_branch
      %221 = sbr.rel (0) target = $region37
    $region36: #{tpu_custom_call.1} parent=1 // pred_region
      %222 = dma.done [#allocation4], 256
    $region37: #{tpu_custom_call.1} parent=1 // pred_fallthru
      _
    %223 = vsyncpa [#allocation3], 1
    %224 = vsyncpa [#allocation6], 1
    %225 = vsyncpa [#allocation4], 1

</llo_original>
